<compile_context>
chip_gen: v6e
topology: v6e:2x2x1
jax: 0.10.0
libtpu: 0.0.40
codegen_flags: <defaults>
</compile_context>

<pallas_src>
import jax
import jax.numpy as jnp
from jax.experimental import pallas as pl
from jax.experimental.pallas import tpu as pltpu


def _pointer_net_kernel(q_ref, w_ref, encT_ref, bias_ref, out_ref):
    """Whole problem resident in VMEM (single grid step).

    q_ref    : (T*B, Q)    f32  query_vec flattened row-major over (T, B)
    w_ref    : (Q, E)      f32  nn.Linear(E, Q, bias=False).weight
    encT_ref : (E, B*S)    f32  src_encodings pre-transposed/flattened
    bias_ref : (T*B, B*S)  f32  additive bias: -BIG on cross-batch blocks and
                                masked tokens, 0 elsewhere
    out_ref  : (T*B, S)    f32  softmax pointer weights (block-diag collapsed)
    """
    S = out_ref.shape[-1]
    BS = bias_ref.shape[-1]
    B = BS // S

    # One fused pair of matmuls over all (t, b) rows.
    qw = jnp.dot(q_ref[...], w_ref[...],
                 preferred_element_type=jnp.float32)          # (T*B, E)
    scores = jnp.dot(qw, encT_ref[...],
                     preferred_element_type=jnp.float32)      # (T*B, B*S)

    # Cross-batch + token masking via a single precomputed additive bias.
    scores = scores + bias_ref[...]

    # Numerically stable softmax over the B*S columns; off-block / masked
    # columns contribute exactly 0 (exp underflow), so this equals the
    # per-batch softmax over S.
    m = jnp.max(scores, axis=-1, keepdims=True)
    e = jnp.exp(scores - m)
    denom = jnp.sum(e, axis=-1, keepdims=True)
    probs = e / denom                                         # exact divide

    # Collapse the block-diagonal: out[r, s] = probs[r, batch(r)*S + s].
    # Off-block probabilities are exactly zero, so summing the B column
    # blocks is exact.  Single full-tile store.
    acc = probs[:, 0:S]
    for b in range(1, B):
        acc = acc + probs[:, b * S:(b + 1) * S]
    out_ref[...] = acc.astype(out_ref.dtype)


def pointer_net_forward(src_encodings, src_token_mask, query_vec, weight):
    """
    src_encodings : (B, S, E) float32
    src_token_mask: (B, S)    bool / {0,1}  (nonzero => masked out)
    query_vec     : (T, B, Q) float32
    weight        : (Q, E)    float32  (nn.Linear(E, Q, bias=False).weight)
    returns       : (T, B, S) float32  softmax pointer weights
    """
    B, S, E = src_encodings.shape
    T, Bq, Q = query_vec.shape
    assert Bq == B
    assert weight.shape == (Q, E)

    TB, BS = T * B, B * S
    neg_big = jnp.float32(jnp.finfo(jnp.float32).min)   # finite "-inf" sentinel

    # (T, B, Q) -> (T*B, Q): free row-major reshape; row r = t*B + b.
    q2 = query_vec.reshape(TB, Q)

    # (B, S, E) -> (E, B*S): one tiny wrapper transpose so the in-kernel
    # contraction is a plain row-by-column MXU matmul.
    encT = jnp.transpose(src_encodings, (2, 0, 1)).reshape(E, BS)

    # Precomputed f32 additive bias: -BIG where the column belongs to another
    # batch (block-diagonal selection) or where the token is masked.
    row_b = (jnp.arange(TB, dtype=jnp.int32) % B)[:, None]    # batch of each row
    col_b = (jnp.arange(BS, dtype=jnp.int32) // S)[None, :]   # batch of each col
    masked = (row_b != col_b) | (src_token_mask.reshape(1, BS) != 0)
    bias = jnp.where(masked, neg_big, jnp.float32(0.0)).astype(jnp.float32)

    out2 = pl.pallas_call(
        _pointer_net_kernel,
        out_shape=jax.ShapeDtypeStruct((TB, S), jnp.float32),
        grid_spec=pltpu.PrefetchScalarGridSpec(
            num_scalar_prefetch=0,
            grid=(1,),                                   # one step: whole problem
            in_specs=[
                pl.BlockSpec((TB, Q), lambda i: (0, 0)),    # query rows
                pl.BlockSpec((Q, E), lambda i: (0, 0)),     # linear weight
                pl.BlockSpec((E, BS), lambda i: (0, 0)),    # enc, pre-transposed
                pl.BlockSpec((TB, BS), lambda i: (0, 0)),   # additive mask bias
            ],
            out_specs=pl.BlockSpec((TB, S), lambda i: (0, 0)),
        ),
        compiler_params=pltpu.CompilerParams(
            dimension_semantics=("arbitrary",)),
    )(q2, weight, encT, bias)

    # Free row-major reshape back to the module's (T, B, S) layout.
    return out2.reshape(T, B, S)


def _reference_forward(src_encodings, src_token_mask, query_vec, weight):
    """Pure-JAX reference mirroring the PyTorch forward (full-f32 matmuls)."""
    hi = jax.lax.Precision.HIGHEST
    src_trans = jnp.einsum("bse,qe->bsq", src_encodings, weight,
                           precision=hi)                         # (B, S, Q)
    w = jnp.einsum("bsq,tbq->tbs", src_trans, query_vec,
                   precision=hi)                                 # (T, B, S)
    w = jnp.where(src_token_mask[None, :, :], -jnp.inf, w)
    return jax.nn.softmax(w, axis=-1)


if __name__ == "__main__":
    # Small shapes implied by the forward: batch=2, src_sent_len=8,
    # src_encoding_size=16 (hidden*2), query_vec_size=32, tgt_action_num=4.
    B, S, E, Q, T = 2, 8, 16, 32, 4

    key = jax.random.PRNGKey(0)
    k_enc, k_q, k_w = jax.random.split(key, 3)

    src_encodings = jax.random.normal(k_enc, (B, S, E), dtype=jnp.float32)
    query_vec = jax.random.normal(k_q, (T, B, Q), dtype=jnp.float32)

    # Deterministic Linear(E, Q, bias=False) weight init (uniform +-1/sqrt(E)).
    bound = 1.0 / (E ** 0.5)
    weight = jax.random.uniform(k_w, (Q, E), dtype=jnp.float32,
                                minval=-bound, maxval=bound)

    # Mask: last 2 source tokens of batch 0 are padding; batch 1 unmasked.
    src_token_mask = jnp.zeros((B, S), dtype=bool).at[0, S - 2:].set(True)

    out = pointer_net_forward(src_encodings, src_token_mask, query_vec, weight)
    out = jax.block_until_ready(out)

    ref = _reference_forward(src_encodings, src_token_mask, query_vec, weight)
    assert out.shape == (T, B, S)
    # Tolerance covers MXU f32 pass-decomposition / contraction-order rounding
    # differences vs the HIGHEST-precision XLA reference (no approx reciprocal
    # anymore, so the softmax itself is exact).
    assert jnp.allclose(out, ref, atol=2e-3, rtol=2e-3), "mismatch vs reference"
    # Rows must sum to ~1.
    assert jnp.allclose(jnp.sum(out, axis=-1), 1.0, atol=1e-3), "rows not normalized"

    print("KERNEL_OK")
</pallas_src>

<mosaic_0001>
module attributes {stable_mosaic.version = 11 : i64} {
  func.func @_pointer_net_kernel(%arg0: i32, %arg1: memref<8x32xf32, #tpu.memory_space<vmem>>, %arg2: memref<32x16xf32, #tpu.memory_space<vmem>>, %arg3: memref<16x16xf32, #tpu.memory_space<vmem>>, %arg4: memref<8x16xf32, #tpu.memory_space<vmem>>, %arg5: memref<8x8xf32, #tpu.memory_space<vmem>>) attributes {dimension_semantics = [#tpu.dimension_semantics<arbitrary>], iteration_bounds = array<i64: 1>, scalar_prefetch = 0 : i64, scratch_operands = 0 : i64, tpu.core_type = #tpu.core_type<tc>, window_params = [{pipeline_mode = #tpu.pipeline_mode<synchronous>, transform_indices = @transform_0, window_bounds = array<i64: 8, 32>}, {pipeline_mode = #tpu.pipeline_mode<synchronous>, transform_indices = @transform_1, window_bounds = array<i64: 32, 16>}, {pipeline_mode = #tpu.pipeline_mode<synchronous>, transform_indices = @transform_2, window_bounds = array<i64: 16, 16>}, {pipeline_mode = #tpu.pipeline_mode<synchronous>, transform_indices = @transform_3, window_bounds = array<i64: 8, 16>}, {pipeline_mode = #tpu.pipeline_mode<synchronous>, transform_indices = @transform_4, window_bounds = array<i64: 8, 8>}]} {
    %c0 = arith.constant 0 : index
    %c0_0 = arith.constant 0 : index
    %0 = vector.load %arg1[%c0, %c0_0] : memref<8x32xf32, #tpu.memory_space<vmem>>, vector<8x32xf32>
    %c0_1 = arith.constant 0 : index
    %c0_2 = arith.constant 0 : index
    %1 = vector.load %arg2[%c0_1, %c0_2] : memref<32x16xf32, #tpu.memory_space<vmem>>, vector<32x16xf32>
    %cst = arith.constant dense<0.000000e+00> : vector<8x16xf32>
    %2 = tpu.matmul %0, %1, %cst {dimension_numbers = #tpu.dot_dimension_numbers<[1], [0], [0], [1], [0, 0, 1, 1], [], []>} : vector<8x32xf32>, vector<32x16xf32>, vector<8x16xf32> -> vector<8x16xf32>
    %c0_3 = arith.constant 0 : index
    %c0_4 = arith.constant 0 : index
    %3 = vector.load %arg3[%c0_3, %c0_4] : memref<16x16xf32, #tpu.memory_space<vmem>>, vector<16x16xf32>
    %cst_5 = arith.constant dense<0.000000e+00> : vector<8x16xf32>
    %4 = tpu.matmul %2, %3, %cst_5 {dimension_numbers = #tpu.dot_dimension_numbers<[1], [0], [0], [1], [0, 0, 1, 1], [], []>} : vector<8x16xf32>, vector<16x16xf32>, vector<8x16xf32> -> vector<8x16xf32>
    %c0_6 = arith.constant 0 : index
    %c0_7 = arith.constant 0 : index
    %5 = vector.load %arg4[%c0_6, %c0_7] : memref<8x16xf32, #tpu.memory_space<vmem>>, vector<8x16xf32>
    %6 = arith.addf %4, %5 : vector<8x16xf32>
    %cst_8 = arith.constant dense<0xFF800000> : vector<8xf32>
    %7 = vector.multi_reduction <maximumf>, %6, %cst_8 [1] : vector<8x16xf32> to vector<8xf32>
    %8 = vector.shape_cast %7 : vector<8xf32> to vector<8x1xf32>
    %9 = vector.broadcast %8 : vector<8x1xf32> to vector<8x16xf32>
    %10 = arith.subf %6, %9 : vector<8x16xf32>
    %11 = math.exp %10 : vector<8x16xf32>
    %cst_9 = arith.constant dense<0.000000e+00> : vector<8xf32>
    %12 = vector.multi_reduction <add>, %11, %cst_9 [1] : vector<8x16xf32> to vector<8xf32>
    %13 = vector.shape_cast %12 : vector<8xf32> to vector<8x1xf32>
    %14 = vector.broadcast %13 : vector<8x1xf32> to vector<8x16xf32>
    %15 = arith.divf %11, %14 : vector<8x16xf32>
    %16 = vector.extract_strided_slice %15 {offsets = [0, 0], sizes = [8, 8], strides = [1, 1]} : vector<8x16xf32> to vector<8x8xf32>
    %17 = vector.extract_strided_slice %15 {offsets = [0, 8], sizes = [8, 8], strides = [1, 1]} : vector<8x16xf32> to vector<8x8xf32>
    %18 = arith.addf %16, %17 : vector<8x8xf32>
    %c0_10 = arith.constant 0 : index
    %c0_11 = arith.constant 0 : index
    %19 = vector.load %arg5[%c0_10, %c0_11] : memref<8x8xf32, #tpu.memory_space<vmem>>, vector<8x8xf32>
    tpu.vector_store %arg5[%c0_10, %c0_11], %18 {strides = array<i32>} : memref<8x8xf32, #tpu.memory_space<vmem>>, vector<8x8xf32>,
    return
  }
  func.func @transform_0(%arg0: i32) -> (i32, i32) {
    %c0_i32 = arith.constant 0 : i32
    %c0_i32_0 = arith.constant 0 : i32
    %c0_i32_1 = arith.constant 0 : i32
    return %c0_i32, %c0_i32_0 : i32, i32
  }
  func.func @transform_1(%arg0: i32) -> (i32, i32) {
    %c0_i32 = arith.constant 0 : i32
    %c0_i32_0 = arith.constant 0 : i32
    %c0_i32_1 = arith.constant 0 : i32
    return %c0_i32, %c0_i32_0 : i32, i32
  }
  func.func @transform_2(%arg0: i32) -> (i32, i32) {
    %c0_i32 = arith.constant 0 : i32
    %c0_i32_0 = arith.constant 0 : i32
    %c0_i32_1 = arith.constant 0 : i32
    return %c0_i32, %c0_i32_0 : i32, i32
  }
  func.func @transform_3(%arg0: i32) -> (i32, i32) {
    %c0_i32 = arith.constant 0 : i32
    %c0_i32_0 = arith.constant 0 : i32
    %c0_i32_1 = arith.constant 0 : i32
    return %c0_i32, %c0_i32_0 : i32, i32
  }
  func.func @transform_4(%arg0: i32) -> (i32, i32) {
    %c0_i32 = arith.constant 0 : i32
    %c0_i32_0 = arith.constant 0 : i32
    %c0_i32_1 = arith.constant 0 : i32
    return %c0_i32, %c0_i32_0 : i32, i32
  }
}

</mosaic_0001>

<llo_original>
// kernel: tpu_custom_call.1
$region0: #{tpu_custom_call.1}
  #allocation0 [shape = 'u32[]', space=smem, size = 0x4, offset = 0x4, fixed_abs, tag = 'smem constant byte address 0x4 - core index']
  #allocation1 [shape = 'u32[144,128]{1,0:T(1,128)}', space=vmem, size = 0x12000, scoped, tag = 'internal scratch']
  %s0 = inlined_call_operand.vmem [shape: f32[8,32], index: 0, kind: input, shape index: {}]
  %s1 = inlined_call_operand.vmem [shape: f32[32,16], index: 1, kind: input, shape index: {}]
  %s2 = inlined_call_operand.vmem [shape: f32[16,16], index: 2, kind: input, shape index: {}]
  %s3 = inlined_call_operand.vmem [shape: f32[8,16], index: 3, kind: input, shape index: {}]
  %s4 = inlined_call_operand.hbm [shape: f32[8,8], index: 4, kind: output, shape index: {}]
  %s5 = sld [smem:[#allocation0]]
  $region26: #{tpu_custom_call.1} parent=0
    _
  %s7 = ssub.s32 1, %s5
  %s8 = scalar_select 0, %s7, %s5
  $region1: #{tpu_custom_call.1} parent=0
    #allocation2 [shape = 'u8[4096]{0}', space=vmem, size = 0x1000, scoped, tag = 'output window, operand 0, single buffered']
    #allocation3 [shape = 's32[1]{0}', space=sflag, size = 0x4, scoped, tag = 'scoped memory for tpu_custom_call.1']
    %9 = vsyncpa [#allocation3], 0
    // Predicated region
    $region2: #{tpu_custom_call.1} parent=1 // pred_check
      _
    $region3: #{tpu_custom_call.1} parent=1 // pred_check_branch
      %11 = sbr.rel (0) target = $region5
    $region4: #{tpu_custom_call.1} parent=1 // pred_region
      _
    $region5: #{tpu_custom_call.1} parent=1 // pred_fallthru
      _
    // Predicated region
    $region6: #{tpu_custom_call.1} parent=1 // pred_check
      _
    $region7: #{tpu_custom_call.1} parent=1 // pred_check_branch
      %13 = sbr.rel (0) target = $region9
    $region8: #{tpu_custom_call.1} parent=1 // pred_region
      _
    $region9: #{tpu_custom_call.1} parent=1 // pred_fallthru
      _
    // Predicated region
    $region10: #{tpu_custom_call.1} parent=1 // pred_check
      _
    $region11: #{tpu_custom_call.1} parent=1 // pred_check_branch
      %15 = sbr.rel (0) target = $region13
    $region12: #{tpu_custom_call.1} parent=1 // pred_region
      _
    $region13: #{tpu_custom_call.1} parent=1 // pred_fallthru
      _
    // Predicated region
    $region14: #{tpu_custom_call.1} parent=1 // pred_check
      _
    $region15: #{tpu_custom_call.1} parent=1 // pred_check_branch
      %17 = sbr.rel (0) target = $region17
    $region16: #{tpu_custom_call.1} parent=1 // pred_region
      _
    $region17: #{tpu_custom_call.1} parent=1 // pred_fallthru
      _
    %v18 = vld [vmem:[%s0] sm:$0xff]
    %v19 = vld [vmem:[%s1] sm:$0xff]
    %v20 = vld [vmem:[%s1 + $0x8] sm:$0xff]
    %v21 = vld [vmem:[%s1 + $0x10] sm:$0xff]
    %v22 = vld [vmem:[%s1 + $0x18] sm:$0xff]
    %vm23 = vcmask 261120
    %v25 = vsel %vm23, %v18, 0
    %27 = vmatprep.subr.mxu0 0.0
    %28 = vmatpush1.msra.mxu0 0.0
    %29 = vmatprep.subr.mxu0 0.0
    %30 = vmatpush1.msra.mxu0 0.0
    %31 = vmatprep.subr.mxu0 0.0
    %32 = vmatpush1.msra.mxu0 0.0
    %33 = vmatprep.subr.mxu0 0.0
    %34 = vmatpush1.msra.mxu0 0.0
    %35 = vmatprep.subr.mxu0 0.0
    %36 = vmatpush1.msra.mxu0 0.0
    %37 = vmatprep.subr.mxu0 0.0
    %38 = vmatpush1.msra.mxu0 0.0
    %39 = vmatprep.subr.mxu0 0.0
    %40 = vmatpush1.msra.mxu0 0.0
    %41 = vmatprep.subr.mxu0 0.0
    %42 = vmatpush1.msra.mxu0 0.0
    %43 = vmatprep.subr.mxu0 0.0
    %44 = vmatpush1.msra.mxu0 0.0
    %45 = vmatprep.subr.mxu0 0.0
    %46 = vmatpush1.msra.mxu0 0.0
    %47 = vmatprep.subr.mxu0 0.0
    %48 = vmatpush1.msra.mxu0 0.0
    %49 = vmatprep.subr.mxu0 0.0
    %50 = vmatpush1.msra.mxu0 0.0
    %51 = vmatprep.subr.mxu0 0.0
    %52 = vmatpush1.msra.mxu0 %v22
    %53 = vmatprep.subr.mxu0 0.0
    %54 = vmatpush1.msra.mxu0 %v21
    %55 = vmatprep.subr.mxu0 0.0
    %56 = vmatpush1.msra.mxu0 %v20
    %57 = vmatprep.subr.mxu0 0.0
    %58 = vmatpush1.msra.mxu0 %v19
    %59 = vmatprep.subr.mxu0 0.0
    %60 = vmatpush2.msra.mxu0 0.0
    %61 = vmatprep.subr.mxu0 0.0
    %62 = vmatpush2.msra.mxu0 0.0
    %63 = vmatprep.subr.mxu0 0.0
    %64 = vmatpush2.msra.mxu0 0.0
    %65 = vmatprep.subr.mxu0 0.0
    %66 = vmatpush2.msra.mxu0 0.0
    %67 = vmatprep.subr.mxu0 0.0
    %68 = vmatpush2.msra.mxu0 0.0
    %69 = vmatprep.subr.mxu0 0.0
    %70 = vmatpush2.msra.mxu0 0.0
    %71 = vmatprep.subr.mxu0 0.0
    %72 = vmatpush2.msra.mxu0 0.0
    %73 = vmatprep.subr.mxu0 0.0
    %74 = vmatpush2.msra.mxu0 0.0
    %75 = vmatprep.subr.mxu0 0.0
    %76 = vmatpush2.msra.mxu0 0.0
    %77 = vmatprep.subr.mxu0 0.0
    %78 = vmatpush2.msra.mxu0 0.0
    %79 = vmatprep.subr.mxu0 0.0
    %80 = vmatpush2.msra.mxu0 0.0
    %81 = vmatprep.subr.mxu0 0.0
    %82 = vmatpush2.msra.mxu0 0.0
    %83 = vmatprep.subr.mxu0 0.0
    %84 = vmatpush2.msra.mxu0 0.0
    %85 = vmatprep.subr.mxu0 0.0
    %86 = vmatpush2.msra.mxu0 0.0
    %87 = vmatprep.subr.mxu0 0.0
    %88 = vmatpush2.msra.mxu0 0.0
    %89 = vmatprep.subr.mxu0 0.0
    %90 = vmatpush2.msra.mxu0 0.0
    %91 = vmatprep.mubr.f32.mxu0 0.0
    %92 = vmatmul.mubr.f32.gmra.mxu0 %v25
    %v93 = vpop.f32.mrf.mxu0
    %v94 = vadd.f32 0.0, %v93
    %v95 = vpop.f32.mrf.mxu0
    %96 = vdwg.mxu0
    %v97 = vld [vmem:[%s2] sm:$0xff]
    %v98 = vld [vmem:[%s2 + $0x8] sm:$0xff]
    %v99 = vld [vmem:[%s3] sm:$0xff]
    %vm100 = vcmask 130048
    %v102 = vsel %vm100, %v94, 0
    %104 = vmatprep.subr.mxu0 0.0
    %105 = vmatpush1.msra.mxu0 0.0
    %106 = vmatprep.subr.mxu0 0.0
    %107 = vmatpush1.msra.mxu0 0.0
    %108 = vmatprep.subr.mxu0 0.0
    %109 = vmatpush1.msra.mxu0 0.0
    %110 = vmatprep.subr.mxu0 0.0
    %111 = vmatpush1.msra.mxu0 0.0
    %112 = vmatprep.subr.mxu0 0.0
    %113 = vmatpush1.msra.mxu0 0.0
    %114 = vmatprep.subr.mxu0 0.0
    %115 = vmatpush1.msra.mxu0 0.0
    %116 = vmatprep.subr.mxu0 0.0
    %117 = vmatpush1.msra.mxu0 0.0
    %118 = vmatprep.subr.mxu0 0.0
    %119 = vmatpush1.msra.mxu0 0.0
    %120 = vmatprep.subr.mxu0 0.0
    %121 = vmatpush1.msra.mxu0 0.0
    %122 = vmatprep.subr.mxu0 0.0
    %123 = vmatpush1.msra.mxu0 0.0
    %124 = vmatprep.subr.mxu0 0.0
    %125 = vmatpush1.msra.mxu0 0.0
    %126 = vmatprep.subr.mxu0 0.0
    %127 = vmatpush1.msra.mxu0 0.0
    %128 = vmatprep.subr.mxu0 0.0
    %129 = vmatpush1.msra.mxu0 0.0
    %130 = vmatprep.subr.mxu0 0.0
    %131 = vmatpush1.msra.mxu0 0.0
    %132 = vmatprep.subr.mxu0 0.0
    %133 = vmatpush1.msra.mxu0 %v98
    %134 = vmatprep.subr.mxu0 0.0
    %135 = vmatpush1.msra.mxu0 %v97
    %136 = vmatprep.subr.mxu0 0.0
    %137 = vmatpush2.msra.mxu0 0.0
    %138 = vmatprep.subr.mxu0 0.0
    %139 = vmatpush2.msra.mxu0 0.0
    %140 = vmatprep.subr.mxu0 0.0
    %141 = vmatpush2.msra.mxu0 0.0
    %142 = vmatprep.subr.mxu0 0.0
    %143 = vmatpush2.msra.mxu0 0.0
    %144 = vmatprep.subr.mxu0 0.0
    %145 = vmatpush2.msra.mxu0 0.0
    %146 = vmatprep.subr.mxu0 0.0
    %147 = vmatpush2.msra.mxu0 0.0
    %148 = vmatprep.subr.mxu0 0.0
    %149 = vmatpush2.msra.mxu0 0.0
    %150 = vmatprep.subr.mxu0 0.0
    %151 = vmatpush2.msra.mxu0 0.0
    %152 = vmatprep.subr.mxu0 0.0
    %153 = vmatpush2.msra.mxu0 0.0
    %154 = vmatprep.subr.mxu0 0.0
    %155 = vmatpush2.msra.mxu0 0.0
    %156 = vmatprep.subr.mxu0 0.0
    %157 = vmatpush2.msra.mxu0 0.0
    %158 = vmatprep.subr.mxu0 0.0
    %159 = vmatpush2.msra.mxu0 0.0
    %160 = vmatprep.subr.mxu0 0.0
    %161 = vmatpush2.msra.mxu0 0.0
    %162 = vmatprep.subr.mxu0 0.0
    %163 = vmatpush2.msra.mxu0 0.0
    %164 = vmatprep.subr.mxu0 0.0
    %165 = vmatpush2.msra.mxu0 0.0
    %166 = vmatprep.subr.mxu0 0.0
    %167 = vmatpush2.msra.mxu0 0.0
    %168 = vmatprep.mubr.f32.mxu0 0.0
    %169 = vmatmul.mubr.f32.gmra.mxu0 %v102
    %v170 = vpop.f32.mrf.mxu0
    %v171 = vadd.f32 %v99, %v170
    %v172 = vpop.f32.mrf.mxu0
    %173 = vdwg.mxu0
    %v174 = vsel %vm100, %v171, -inf
    %175 = vmax.xlane.f32.xlu0 %v174
    %v176 = vpop.xlane.xlu0 %175
    %v177 = vsub.f32 %v171, %v176
    %v178 = vmul.f32 %v177, 1.442695
    %v179 = vpow.pop %v178
    %v180 = vsel %vm100, %v179, 0.0
    %181 = vadd.xlane.f32.xlu0 %v180
    %v182 = vpop.xlane.xlu0 %181
    %v183 = vrcp.pop %v182
    %v184 = vmul.f32 %v179, %v183
    %186 = vrot.lane.b32.xlu0 %v184, 120
    %v187 = vpop.permute.xlu0 %186
    %v189 = vadd.f32 %v184, %v187
    %vm190 = vcmask 64512
    %191 = vst.msk [vmem:[#allocation2] sm:$0xff] %vm190, %v189
    // Predicated region
    $region18: #{tpu_custom_call.1} parent=1 // pred_check
      _
    $region19: #{tpu_custom_call.1} parent=1 // pred_check_branch
      %193 = sbr.rel (0) target = $region21
    $region20: #{tpu_custom_call.1} parent=1 // pred_region
      %s195 = ssub.s32 128, 128
      %196 = vsyncadd [#allocation3], %s195
      %s198 = sshll.u32 [#allocation2], 4
      %s199 = int_to_ptr.vmem [resolvable:$true] %s198
      %201 = dma.vmem_to_hbm [thread:$0]  %s199, 128, %s4, [#allocation3]
    $region21: #{tpu_custom_call.1} parent=1 // pred_fallthru
      _
    // Predicated region
    $region22: #{tpu_custom_call.1} parent=1 // pred_check
      _
    $region23: #{tpu_custom_call.1} parent=1 // pred_check_branch
      %203 = sbr.rel (0) target = $region25
    $region24: #{tpu_custom_call.1} parent=1 // pred_region
      %204 = dma.done [#allocation3], 128
    $region25: #{tpu_custom_call.1} parent=1 // pred_fallthru
      _
    %205 = vsyncpa [#allocation3], 1

</llo_original>
